<compile_context>
chip_gen: v7x
topology: tpu7x:2x2x1
jax: 0.10.0
libtpu: 0.0.40
codegen_flags: <defaults>
</compile_context>

<pallas_src>
import jax
import jax.numpy as jnp
from jax.experimental import pallas as pl
from jax.experimental.pallas import tpu as pltpu

_TARGET_TILE_ELEMS = 1 << 20          # ~4 MiB of f32 per tile
_LANE_TARGET = 2048                   # lane-block target (multiple of 128)
_ROW_CAP = 4096                       # row-block cap (multiple of 8)
_VMEM_LIMIT_BYTES = 40 * 1024 * 1024  # explicit scoped-VMEM limit (< v7x 64 MiB phys)


def _normalize_kernel(scale_ref, bias_ref, x_ref, o_ref):
    # scale_ref / bias_ref: VMEM (br, 1) f32 — broadcast along lanes (free VPU bcast)
    # x_ref / o_ref:        VMEM (br, bl); f32 compute, cast only on store.
    x = x_ref[...].astype(jnp.float32)
    o_ref[...] = (x * scale_ref[...] + bias_ref[...]).astype(o_ref.dtype)


def _pick_lane_block(L: int, target: int) -> int:
    """Lane block: full extent when that avoids a ragged remainder column,
    otherwise the largest 128-aligned candidate <= target that divides L
    (falls back to an aligned, possibly ragged-tiled block)."""
    if L <= 2 * target:
        return L                               # full extent is always legal
    for cand in range(target, 127, -128):
        if L % cand == 0:
            return cand
    return (target // 128) * 128


def _pick_row_block(R: int, target: int) -> int:
    """Row block: full extent if it fits, else an 8-aligned divisor of R if one
    exists below target, else the largest 8-aligned block (ragged last block)."""
    if R <= target:
        return R
    for cand in range(target, 7, -8):
        if R % cand == 0:
            return cand
    return (target // 8) * 8


def _row_fold(R: int, L: int) -> int:
    """Largest power-of-two fold f with L % f == 0 and (L // f) % 128 == 0,
    stopping once R * f reaches 8 sublanes.  1 means no fold."""
    f = 1
    while R * f < 8:
        nf = f * 2
        if L % nf != 0 or (L // nf) % 128 != 0:
            break
        f = nf
    return f


def normalize(x: jax.Array, mean: jax.Array, std: jax.Array, out_dtype=None) -> jax.Array:
    """x: (N, C, H, W); mean, std: (C,). Returns (x - mean[c]) / std[c].

    Floating x keeps its dtype by default; integer (e.g. uint8 image) x is decoded
    to float32 inside the kernel.  out_dtype overrides the output dtype (bf16 cuts
    HBM write traffic in half)."""
    N, C, H, W = x.shape
    assert mean.shape == (C,) and std.shape == (C,)
    if out_dtype is None:
        out_dtype = x.dtype if jnp.issubdtype(x.dtype, jnp.floating) else jnp.float32
    assert jnp.issubdtype(jnp.dtype(out_dtype), jnp.floating), "output must be floating"

    R, L = N * C, H * W
    fold = _row_fold(R, L)          # small-batch: fill all 8 sublanes per vreg
    Rf, Lf = R * fold, L // fold
    x2 = x.reshape(Rf, Lf)          # free: NCHW is contiguous

    # Per-channel affine params, replicated per (n, c[, fold]) row.  C-length work
    # in the wrapper is negligible; turns the kernel into a pure FMA.
    scale_c = 1.0 / std.astype(jnp.float32)
    bias_c = (-mean.astype(jnp.float32)) * scale_c
    scale_rows = jnp.repeat(jnp.tile(scale_c, N), fold).reshape(Rf, 1)
    bias_rows = jnp.repeat(jnp.tile(bias_c, N), fold).reshape(Rf, 1)

    # ~4 MiB tiles: big enough that the ~0.35 us/grid-step overhead is <10% even at
    # v7x's ~3.2 TB/s HBM, small enough that in+out double buffers stay ~16 MiB.
    bl = _pick_lane_block(Lf, _LANE_TARGET)
    br_target = max(8, min(_ROW_CAP, (_TARGET_TILE_ELEMS // max(bl, 1)) // 8 * 8))
    br = _pick_row_block(Rf, br_target)
    grid = (pl.cdiv(Rf, br), pl.cdiv(Lf, bl))

    out2 = pl.pallas_call(
        _normalize_kernel,
        out_shape=jax.ShapeDtypeStruct((Rf, Lf), out_dtype),
        grid_spec=pl.GridSpec(
            grid=grid,
            in_specs=[
                pl.BlockSpec((br, 1), lambda i, j: (i, 0)),   # scale per row
                pl.BlockSpec((br, 1), lambda i, j: (i, 0)),   # bias per row
                pl.BlockSpec((br, bl), lambda i, j: (i, j)),  # x tile
            ],
            out_specs=pl.BlockSpec((br, bl), lambda i, j: (i, j)),
        ),
        compiler_params=pltpu.CompilerParams(
            dimension_semantics=("parallel", "parallel"),
            vmem_limit_bytes=_VMEM_LIMIT_BYTES,
        ),
    )(scale_rows, bias_rows, x2)

    return out2.reshape(N, C, H, W)


def _reference(x, mean, std):
    return (x - mean[None, :, None, None]) / std[None, :, None, None]


if __name__ == "__main__":
    # Module defaults: 3-channel ImageNet mean/std, float32.
    mean = jnp.asarray([0.485, 0.456, 0.406], dtype=jnp.float32)
    std = jnp.asarray([0.229, 0.224, 0.225], dtype=jnp.float32)

    key = jax.random.PRNGKey(0)
    k1, k2, k3 = jax.random.split(key, 3)

    # Primary check: f32 NCHW, exercises the small-R fold path (N*C = 6 < 8).
    x = jax.random.uniform(k1, (2, 3, 16, 16), dtype=jnp.float32)
    out = jax.block_until_ready(normalize(x, mean, std))
    ref = _reference(x, mean, std)
    assert out.shape == x.shape and out.dtype == x.dtype
    assert jnp.allclose(out, ref, atol=1e-5, rtol=1e-5)

    # Ragged lane extent (H*W = 1600, not a 128-multiple): full-extent lane block.
    x2 = jax.random.uniform(k2, (2, 3, 40, 40), dtype=jnp.float32)
    out2 = jax.block_until_ready(normalize(x2, mean, std))
    assert jnp.allclose(out2, _reference(x2, mean, std), atol=1e-5, rtol=1e-5)

    # Fused uint8 decode -> f32 normalize (HBM read traffic / 4).
    x3 = jax.random.randint(k3, (2, 3, 16, 16), 0, 256, dtype=jnp.uint8)
    out3 = jax.block_until_ready(normalize(x3, mean, std))
    ref3 = _reference(x3.astype(jnp.float32), mean, std)
    assert out3.dtype == jnp.float32
    assert jnp.allclose(out3, ref3, atol=1e-3, rtol=1e-5)

    # Fused bf16 output (HBM write traffic / 2); compute stays f32 in-kernel.
    out4 = jax.block_until_ready(normalize(x, mean, std, out_dtype=jnp.bfloat16))
    assert out4.dtype == jnp.bfloat16
    assert jnp.allclose(out4.astype(jnp.float32), ref, atol=3e-2, rtol=3e-2)

    print("KERNEL_OK")
</pallas_src>

<mosaic_0001>
module attributes {stable_mosaic.version = 11 : i64} {
  func.func @_normalize_kernel(%arg0: i32, %arg1: i32, %arg2: memref<12x1xf32, #tpu.memory_space<vmem>>, %arg3: memref<12x1xf32, #tpu.memory_space<vmem>>, %arg4: memref<12x128xf32, #tpu.memory_space<vmem>>, %arg5: memref<12x128xf32, #tpu.memory_space<vmem>>) attributes {dimension_semantics = [#tpu.dimension_semantics<parallel>, #tpu.dimension_semantics<parallel>], iteration_bounds = array<i64: 1, 1>, scalar_prefetch = 0 : i64, scratch_operands = 0 : i64, tpu.core_type = #tpu.core_type<tc>, window_params = [{transform_indices = @transform_0, window_bounds = array<i64: 12, 1>}, {transform_indices = @transform_1, window_bounds = array<i64: 12, 1>}, {transform_indices = @transform_2, window_bounds = array<i64: 12, 128>}, {transform_indices = @transform_3, window_bounds = array<i64: 12, 128>}]} {
    %c0 = arith.constant 0 : index
    %c0_0 = arith.constant 0 : index
    %0 = vector.load %arg4[%c0, %c0_0] : memref<12x128xf32, #tpu.memory_space<vmem>>, vector<12x128xf32>
    %c0_1 = arith.constant 0 : index
    %c0_2 = arith.constant 0 : index
    %1 = vector.load %arg2[%c0_1, %c0_2] : memref<12x1xf32, #tpu.memory_space<vmem>>, vector<12x1xf32>
    %2 = vector.broadcast %1 : vector<12x1xf32> to vector<12x128xf32>
    %3 = arith.mulf %0, %2 : vector<12x128xf32>
    %c0_3 = arith.constant 0 : index
    %c0_4 = arith.constant 0 : index
    %4 = vector.load %arg3[%c0_3, %c0_4] : memref<12x1xf32, #tpu.memory_space<vmem>>, vector<12x1xf32>
    %5 = vector.broadcast %4 : vector<12x1xf32> to vector<12x128xf32>
    %6 = arith.addf %3, %5 : vector<12x128xf32>
    %c0_5 = arith.constant 0 : index
    %c0_6 = arith.constant 0 : index
    %7 = vector.load %arg5[%c0_5, %c0_6] : memref<12x128xf32, #tpu.memory_space<vmem>>, vector<12x128xf32>
    tpu.vector_store %arg5[%c0_5, %c0_6], %6 {strides = array<i32>} : memref<12x128xf32, #tpu.memory_space<vmem>>, vector<12x128xf32>,
    return
  }
  func.func @transform_0(%arg0: i32, %arg1: i32) -> (i32, i32) {
    %c0_i32 = arith.constant 0 : i32
    %c0_i32_0 = arith.constant 0 : i32
    return %arg0, %c0_i32 : i32, i32
  }
  func.func @transform_1(%arg0: i32, %arg1: i32) -> (i32, i32) {
    %c0_i32 = arith.constant 0 : i32
    %c0_i32_0 = arith.constant 0 : i32
    return %arg0, %c0_i32 : i32, i32
  }
  func.func @transform_2(%arg0: i32, %arg1: i32) -> (i32, i32) {
    %c0_i32 = arith.constant 0 : i32
    return %arg0, %arg1 : i32, i32
  }
  func.func @transform_3(%arg0: i32, %arg1: i32) -> (i32, i32) {
    %c0_i32 = arith.constant 0 : i32
    return %arg0, %arg1 : i32, i32
  }
}

</mosaic_0001>

<llo_original>
// kernel: tpu_custom_call.1
$region0: #{tpu_custom_call.1}
  #allocation0 [shape = 'u32[]', space=smem, size = 0x4, offset = 0x4, fixed_abs, tag = 'smem constant byte address 0x4 - core index']
  #allocation1 [shape = 'u32[144,128]{1,0:T(1,128)}', space=vmem, size = 0x12000, scoped, tag = 'internal scratch']
  %s0 = inlined_call_operand.vmem [shape: f32[12,1], index: 0, kind: input, shape index: {}]
  %s1 = inlined_call_operand.vmem [shape: f32[12,1], index: 1, kind: input, shape index: {}]
  %s2 = inlined_call_operand.vmem [shape: f32[12,128], index: 2, kind: input, shape index: {}]
  %s3 = inlined_call_operand.hbm [shape: f32[12,128], index: 3, kind: output, shape index: {}]
  %s4 = sld [smem:[#allocation0]]
  $region22: #{tpu_custom_call.1} parent=0
    _
  %s6 = ssub.s32 1, %s4
  %s7 = scalar_select 0, %s6, %s4
  $region1: #{tpu_custom_call.1} parent=0
    #allocation2 [shape = 'u8[8192]{0}', space=vmem, size = 0x2000, scoped, tag = 'output window, operand 0, single buffered']
    #allocation3 [shape = 's32[1]{0}', space=sflag, size = 0x4, scoped, tag = 'scoped memory for tpu_custom_call.1']
    %8 = vsyncpa [#allocation3], 0
    // Predicated region
    $region2: #{tpu_custom_call.1} parent=1 // pred_check
      _
    $region3: #{tpu_custom_call.1} parent=1 // pred_check_branch
      %10 = sbr.rel (0) target = $region5
    $region4: #{tpu_custom_call.1} parent=1 // pred_region
      _
    $region5: #{tpu_custom_call.1} parent=1 // pred_fallthru
      _
    // Predicated region
    $region6: #{tpu_custom_call.1} parent=1 // pred_check
      _
    $region7: #{tpu_custom_call.1} parent=1 // pred_check_branch
      %12 = sbr.rel (0) target = $region9
    $region8: #{tpu_custom_call.1} parent=1 // pred_region
      _
    $region9: #{tpu_custom_call.1} parent=1 // pred_fallthru
      _
    // Predicated region
    $region10: #{tpu_custom_call.1} parent=1 // pred_check
      _
    $region11: #{tpu_custom_call.1} parent=1 // pred_check_branch
      %14 = sbr.rel (0) target = $region13
    $region12: #{tpu_custom_call.1} parent=1 // pred_region
      _
    $region13: #{tpu_custom_call.1} parent=1 // pred_fallthru
      _
    %v15 = vld [vmem:[%s2] sm:$0xff]
    %v16 = vld [vmem:[%s2 + $0x8] sm:$0xf]
    %v17 = vld [vmem:[%s0] sm:$0xff]
    %v18 = vld [vmem:[%s0 + $0x8] sm:$0xf]
    %20 = vset.pattern.permute.xlu0 0
    %21 = vperm.xlu0 %20, %v17
    %v22 = vpop.permute.xlu0 %21
    %25 = vset.pattern.permute.xlu0 0
    %26 = vperm.xlu0 %25, %v18
    %v27 = vpop.permute.xlu0 %26
    %v29 = vmul.f32 %v15, %v22
    %v30 = vmul.f32 %v16, %v27
    %v31 = vld [vmem:[%s1] sm:$0xff]
    %v32 = vld [vmem:[%s1 + $0x8] sm:$0xf]
    %34 = vset.pattern.permute.xlu0 0
    %35 = vperm.xlu0 %34, %v31
    %v36 = vpop.permute.xlu0 %35
    %39 = vset.pattern.permute.xlu0 0
    %40 = vperm.xlu0 %39, %v32
    %v41 = vpop.permute.xlu0 %40
    %v43 = vadd.f32 %v29, %v36
    %v44 = vadd.f32 %v30, %v41
    %45 = vst [vmem:[#allocation2] sm:$0xff] %v43
    %46 = vst [vmem:[#allocation2 + $0x8] sm:$0xf] %v44
    // Predicated region
    $region14: #{tpu_custom_call.1} parent=1 // pred_check
      _
    $region15: #{tpu_custom_call.1} parent=1 // pred_check_branch
      %48 = sbr.rel (0) target = $region17
    $region16: #{tpu_custom_call.1} parent=1 // pred_region
      %s50 = ssub.s32 256, 256
      %51 = vsyncadd [#allocation3], %s50
      %s52 = sshll.u32 [#allocation2], 4
      %s53 = int_to_ptr.vmem [resolvable:$true] %s52
      %58 = dma.vmem_to_hbm [thread:$0]  %s53, 256, %s3, [#allocation3], 128, 128, 8
    $region17: #{tpu_custom_call.1} parent=1 // pred_fallthru
      _
    // Predicated region
    $region18: #{tpu_custom_call.1} parent=1 // pred_check
      _
    $region19: #{tpu_custom_call.1} parent=1 // pred_check_branch
      %60 = sbr.rel (0) target = $region21
    $region20: #{tpu_custom_call.1} parent=1 // pred_region
      %61 = dma.done [#allocation3], 256
    $region21: #{tpu_custom_call.1} parent=1 // pred_fallthru
      _
    %62 = vsyncpa [#allocation3], 1

</llo_original>
